<compile_context>
chip_gen: v5e
topology: v5e:2x2
jax: 0.10.0
libtpu: 0.0.40
codegen_flags: <defaults>
</compile_context>

<pallas_src>
from functools import partial

import jax
import jax.numpy as jnp
from jax.experimental import pallas as pl
from jax.experimental.pallas import tpu as pltpu


def _round_up(x, m):
    return (x + m - 1) // m * m


def _make_kernel(true_rows, seq_len, max_thr, grad_w):
    """Build the fused loss kernel for static (true_rows, seq_len)."""
    inv_n = 1.0 / float(true_rows * seq_len)
    inv_d = 1.0 / float(true_rows * (seq_len - 1)) if seq_len > 1 else 0.0

    def kernel(pred_ref, true_ref, o_ref, acc_ref):
        # acc_ref: SMEM f32[3] = [sum_sq_err, sum_pattern, sum_gradient]
        @pl.when(pl.program_id(0) == 0)
        def _init():
            acc_ref[0] = jnp.float32(0.0)
            acc_ref[1] = jnp.float32(0.0)
            acc_ref[2] = jnp.float32(0.0)

        p = pred_ref[...]
        t = true_ref[...]

        err = p - t
        acc_ref[0] += jnp.sum(err * err)

        if seq_len > 1:  # static Python branch
            pd = jnp.abs(p[:, 1:] - p[:, :-1])
            td = jnp.abs(t[:, 1:] - t[:, :-1])
            d = pd - td
            acc_ref[1] += jnp.sum(d * d)
            g = jnp.maximum(pd - jnp.maximum(td, max_thr), 0.0)
            acc_ref[2] += jnp.sum(g * g)

        # Scalar epilogue (a few scalar-unit ops per step; the value written on
        # the final grid step is the loss).
        o_ref[0, 0] = (acc_ref[0] * inv_n
                       + 0.3 * inv_d * acc_ref[1]
                       + grad_w * inv_d * acc_ref[2])

    return kernel


@partial(jax.jit,
         static_argnames=("max_gradient_threshold", "gradient_weight", "block_rows"))
def gradient_constraint_loss(impedance_pred, impedance_true,
                             max_gradient_threshold=0.15,
                             gradient_weight=0.1,
                             block_rows=256):
    """Fused GradientConstraintLoss forward. Returns a scalar f32 loss."""
    pred = impedance_pred
    true = impedance_true

    if pred.ndim == 1:
        # PyTorch path: seq_len == 1 -> plain MSE.
        pred = pred[:, None]
        true = true[:, None]
    elif pred.ndim > 2:
        # Diffs are along dim 1 independent of trailing dims; folding trailing
        # dims into the batch axis is exact (same element sets for every mean).
        s = pred.shape[1]
        pred = jnp.moveaxis(pred, 1, -1).reshape(-1, s)
        true = jnp.moveaxis(true, 1, -1).reshape(-1, s)

    if pred.dtype != jnp.float32:
        pred = pred.astype(jnp.float32)
        true = true.astype(jnp.float32)

    B, S = pred.shape

    # Row tile: multiple of 8 sublanes; "biggest tile that fits" — at the default
    # block_rows=256, VMEM use is 2 inputs * 2 buffers * 256 * S * 4B, comfortably
    # under the v7x 64 MiB / default scoped VMEM for realistic seq lengths.
    tm = _round_up(min(block_rows, _round_up(B, 8)), 8)
    b_pad = _round_up(B, tm)
    if b_pad != B:
        # Zero rows contribute exactly 0 to all three partial sums -> exact.
        pred = jnp.pad(pred, ((0, b_pad - B), (0, 0)))
        true = jnp.pad(true, ((0, b_pad - B), (0, 0)))

    grid = (b_pad // tm,)
    kernel = _make_kernel(B, S, float(max_gradient_threshold), float(gradient_weight))

    out = pl.pallas_call(
        kernel,
        out_shape=jax.ShapeDtypeStruct((1, 1), jnp.float32),
        grid_spec=pltpu.PrefetchScalarGridSpec(
            num_scalar_prefetch=0,
            grid=grid,
            in_specs=[
                pl.BlockSpec((tm, S), lambda i: (i, 0)),
                pl.BlockSpec((tm, S), lambda i: (i, 0)),
            ],
            out_specs=pl.BlockSpec((1, 1), lambda i: (0, 0),
                                   memory_space=pltpu.MemorySpace.SMEM),
            scratch_shapes=[pltpu.SMEM((3,), jnp.float32)],
        ),
        compiler_params=pltpu.CompilerParams(
            # The grid axis carries the SMEM accumulator -> must be "arbitrary".
            dimension_semantics=("arbitrary",),
        ),
    )(pred, true)
    return out[0, 0]


def gradient_constraint_loss_reference(pred, true,
                                       max_gradient_threshold=0.15,
                                       gradient_weight=0.1):
    """Pure-JAX replica of the PyTorch forward, for correctness checks."""
    mse = jnp.mean((pred - true) ** 2)
    seq_len = pred.shape[1] if pred.ndim > 1 else 1
    if seq_len == 1:
        return mse
    td = jnp.abs(true[:, 1:] - true[:, :-1])
    pd = jnp.abs(pred[:, 1:] - pred[:, :-1])
    pattern = jnp.mean((pd - td) ** 2)
    thr = jnp.maximum(td, max_gradient_threshold)
    grad = jnp.mean(jnp.maximum(pd - thr, 0.0) ** 2)
    return mse + 0.3 * pattern + gradient_weight * grad


if __name__ == "__main__":
    key = jax.random.PRNGKey(0)
    k1, k2, k3, k4 = jax.random.split(key, 4)

    # Primary case: [batch, seq] impedance traces; block_rows=8 -> 4 grid steps
    # so pipelining + accumulation across the grid is exercised.
    B, S = 32, 128
    imp_true = 3.0 + jnp.cumsum(0.1 * jax.random.normal(k1, (B, S), jnp.float32), axis=1)
    imp_pred = imp_true + 0.05 * jax.random.normal(k2, (B, S), jnp.float32)

    loss = jax.block_until_ready(gradient_constraint_loss(imp_pred, imp_true, block_rows=8))
    ref = gradient_constraint_loss_reference(imp_pred, imp_true)
    assert loss.shape == ()
    assert jnp.allclose(loss, ref, atol=1e-5, rtol=1e-4), (loss, ref)

    # Ragged batch / non-128 seq (exercises the zero-row padding path).
    B2, S2 = 10, 33
    t2 = jax.random.normal(k3, (B2, S2), jnp.float32)
    p2 = t2 + 0.2 * jax.random.normal(k4, (B2, S2), jnp.float32)
    loss2 = jax.block_until_ready(gradient_constraint_loss(p2, t2, block_rows=8))
    ref2 = gradient_constraint_loss_reference(p2, t2)
    assert jnp.allclose(loss2, ref2, atol=1e-5, rtol=1e-4), (loss2, ref2)

    # seq_len == 1 path (1-D input -> plain MSE, matching the PyTorch early return).
    p3 = jax.random.normal(k1, (16,), jnp.float32)
    t3 = jax.random.normal(k2, (16,), jnp.float32)
    loss3 = jax.block_until_ready(gradient_constraint_loss(p3, t3))
    ref3 = jnp.mean((p3 - t3) ** 2)
    assert jnp.allclose(loss3, ref3, atol=1e-6, rtol=1e-5), (loss3, ref3)

    print("KERNEL_OK")
</pallas_src>

<mosaic_0001>
module attributes {stable_mosaic.version = 11 : i64} {
  func.func @kernel(%arg0: i32, %arg1: memref<8x128xf32, #tpu.memory_space<vmem>>, %arg2: memref<8x128xf32, #tpu.memory_space<vmem>>, %arg3: memref<1x1xf32, #tpu.memory_space<smem>>, %arg4: memref<3xf32, #tpu.memory_space<smem>>) attributes {dimension_semantics = [#tpu.dimension_semantics<arbitrary>], iteration_bounds = array<i64: 4>, scalar_prefetch = 0 : i64, scratch_operands = 1 : i64, tpu.core_type = #tpu.core_type<tc>, window_params = [{transform_indices = @transform_0, window_bounds = array<i64: 8, 128>}, {transform_indices = @transform_1, window_bounds = array<i64: 8, 128>}, {transform_indices = @transform_2, window_bounds = array<i64: 1, 1>}]} {
    %c0_i32 = arith.constant 0 : i32
    %0 = arith.cmpi eq, %arg0, %c0_i32 : i32
    %1 = arith.extui %0 : i1 to i32
    %c0_i32_0 = arith.constant 0 : i32
    %2 = arith.cmpi ne, %1, %c0_i32_0 : i32
    scf.if %2 {
      %cst_20 = arith.constant 0.000000e+00 : f32
      %c0_21 = arith.constant 0 : index
      %53 = memref.load %arg4[%c0_21] : memref<3xf32, #tpu.memory_space<smem>>
      memref.store %cst_20, %arg4[%c0_21] : memref<3xf32, #tpu.memory_space<smem>>
      %cst_22 = arith.constant 0.000000e+00 : f32
      %c1_23 = arith.constant 1 : index
      %54 = memref.load %arg4[%c1_23] : memref<3xf32, #tpu.memory_space<smem>>
      memref.store %cst_22, %arg4[%c1_23] : memref<3xf32, #tpu.memory_space<smem>>
      %cst_24 = arith.constant 0.000000e+00 : f32
      %c2_25 = arith.constant 2 : index
      %55 = memref.load %arg4[%c2_25] : memref<3xf32, #tpu.memory_space<smem>>
      memref.store %cst_24, %arg4[%c2_25] : memref<3xf32, #tpu.memory_space<smem>>
    } else {
    }
    %c0 = arith.constant 0 : index
    %c0_1 = arith.constant 0 : index
    %3 = vector.load %arg1[%c0, %c0_1] : memref<8x128xf32, #tpu.memory_space<vmem>>, vector<8x128xf32>
    %c0_2 = arith.constant 0 : index
    %c0_3 = arith.constant 0 : index
    %4 = vector.load %arg2[%c0_2, %c0_3] : memref<8x128xf32, #tpu.memory_space<vmem>>, vector<8x128xf32>
    %5 = arith.subf %3, %4 : vector<8x128xf32>
    %c0_4 = arith.constant 0 : index
    %6 = memref.load %arg4[%c0_4] : memref<3xf32, #tpu.memory_space<smem>>
    %7 = arith.mulf %5, %5 : vector<8x128xf32>
    %8 = vector.shape_cast %7 : vector<8x128xf32> to vector<1x8x128xf32>
    %cst = arith.constant dense<0.000000e+00> : vector<1xf32>
    %9 = vector.multi_reduction <add>, %8, %cst [1, 2] : vector<1x8x128xf32> to vector<1xf32>
    %10 = vector.shape_cast %9 : vector<1xf32> to vector<1x1x1xf32>
    %11 = vector.extract %10[0, 0, 0] : f32 from vector<1x1x1xf32>
    %12 = arith.addf %6, %11 : f32
    %c0_5 = arith.constant 0 : index
    %13 = memref.load %arg4[%c0_5] : memref<3xf32, #tpu.memory_space<smem>>
    memref.store %12, %arg4[%c0_5] : memref<3xf32, #tpu.memory_space<smem>>
    %14 = vector.extract_strided_slice %3 {offsets = [0, 1], sizes = [8, 127], strides = [1, 1]} : vector<8x128xf32> to vector<8x127xf32>
    %15 = vector.extract_strided_slice %3 {offsets = [0, 0], sizes = [8, 127], strides = [1, 1]} : vector<8x128xf32> to vector<8x127xf32>
    %16 = arith.subf %14, %15 : vector<8x127xf32>
    %17 = math.absf %16 : vector<8x127xf32>
    %18 = vector.extract_strided_slice %4 {offsets = [0, 1], sizes = [8, 127], strides = [1, 1]} : vector<8x128xf32> to vector<8x127xf32>
    %19 = vector.extract_strided_slice %4 {offsets = [0, 0], sizes = [8, 127], strides = [1, 1]} : vector<8x128xf32> to vector<8x127xf32>
    %20 = arith.subf %18, %19 : vector<8x127xf32>
    %21 = math.absf %20 : vector<8x127xf32>
    %22 = arith.subf %17, %21 : vector<8x127xf32>
    %c1 = arith.constant 1 : index
    %23 = memref.load %arg4[%c1] : memref<3xf32, #tpu.memory_space<smem>>
    %24 = arith.mulf %22, %22 : vector<8x127xf32>
    %25 = vector.shape_cast %24 : vector<8x127xf32> to vector<1x8x127xf32>
    %cst_6 = arith.constant dense<0.000000e+00> : vector<1xf32>
    %26 = vector.multi_reduction <add>, %25, %cst_6 [1, 2] : vector<1x8x127xf32> to vector<1xf32>
    %27 = vector.shape_cast %26 : vector<1xf32> to vector<1x1x1xf32>
    %28 = vector.extract %27[0, 0, 0] : f32 from vector<1x1x1xf32>
    %29 = arith.addf %23, %28 : f32
    %c1_7 = arith.constant 1 : index
    %30 = memref.load %arg4[%c1_7] : memref<3xf32, #tpu.memory_space<smem>>
    memref.store %29, %arg4[%c1_7] : memref<3xf32, #tpu.memory_space<smem>>
    %cst_8 = arith.constant 1.500000e-01 : f32
    %31 = vector.broadcast %cst_8 : f32 to vector<8x127xf32>
    %32 = arith.maximumf %21, %31 : vector<8x127xf32>
    %33 = arith.subf %17, %32 : vector<8x127xf32>
    %cst_9 = arith.constant 0.000000e+00 : f32
    %34 = vector.broadcast %cst_9 : f32 to vector<8x127xf32>
    %35 = arith.maximumf %33, %34 : vector<8x127xf32>
    %c2 = arith.constant 2 : index
    %36 = memref.load %arg4[%c2] : memref<3xf32, #tpu.memory_space<smem>>
    %37 = arith.mulf %35, %35 : vector<8x127xf32>
    %38 = vector.shape_cast %37 : vector<8x127xf32> to vector<1x8x127xf32>
    %cst_10 = arith.constant dense<0.000000e+00> : vector<1xf32>
    %39 = vector.multi_reduction <add>, %38, %cst_10 [1, 2] : vector<1x8x127xf32> to vector<1xf32>
    %40 = vector.shape_cast %39 : vector<1xf32> to vector<1x1x1xf32>
    %41 = vector.extract %40[0, 0, 0] : f32 from vector<1x1x1xf32>
    %42 = arith.addf %36, %41 : f32
    %c2_11 = arith.constant 2 : index
    %43 = memref.load %arg4[%c2_11] : memref<3xf32, #tpu.memory_space<smem>>
    memref.store %42, %arg4[%c2_11] : memref<3xf32, #tpu.memory_space<smem>>
    %c0_12 = arith.constant 0 : index
    %44 = memref.load %arg4[%c0_12] : memref<3xf32, #tpu.memory_space<smem>>
    %cst_13 = arith.constant 2.44140625E-4 : f32
    %45 = arith.mulf %44, %cst_13 : f32
    %c1_14 = arith.constant 1 : index
    %46 = memref.load %arg4[%c1_14] : memref<3xf32, #tpu.memory_space<smem>>
    %cst_15 = arith.constant 7.38188973E-5 : f32
    %47 = arith.mulf %cst_15, %46 : f32
    %48 = arith.addf %45, %47 : f32
    %c2_16 = arith.constant 2 : index
    %49 = memref.load %arg4[%c2_16] : memref<3xf32, #tpu.memory_space<smem>>
    %cst_17 = arith.constant 2.460630e-05 : f32
    %50 = arith.mulf %cst_17, %49 : f32
    %51 = arith.addf %48, %50 : f32
    %c0_18 = arith.constant 0 : index
    %c0_19 = arith.constant 0 : index
    %52 = memref.load %arg3[%c0_18, %c0_19] : memref<1x1xf32, #tpu.memory_space<smem>>
    memref.store %51, %arg3[%c0_18, %c0_19] : memref<1x1xf32, #tpu.memory_space<smem>>
    return
  }
  func.func @transform_0(%arg0: i32) -> (i32, i32) {
    %c0_i32 = arith.constant 0 : i32
    %c0_i32_0 = arith.constant 0 : i32
    return %arg0, %c0_i32 : i32, i32
  }
  func.func @transform_1(%arg0: i32) -> (i32, i32) {
    %c0_i32 = arith.constant 0 : i32
    %c0_i32_0 = arith.constant 0 : i32
    return %arg0, %c0_i32 : i32, i32
  }
  func.func @transform_2(%arg0: i32) -> (i32, i32) {
    %c0_i32 = arith.constant 0 : i32
    %c0_i32_0 = arith.constant 0 : i32
    %c0_i32_1 = arith.constant 0 : i32
    return %c0_i32, %c0_i32_0 : i32, i32
  }
}

</mosaic_0001>

<llo_original>
// kernel: gradient_constraint_loss.1
$region0: #{gradient_constraint_loss.1}
  #allocation0 [shape = 'u32[]', space=smem, size = 0x4, offset = 0x4, fixed_abs, tag = 'smem constant byte address 0x4 - core index']
  #allocation1 [shape = 'u32[72,128]{1,0:T(1,128)}', space=vmem, size = 0x9000, scoped, tag = 'internal scratch']
  #allocation2 [shape = 'f32[3]{0:T(128)}', space=smem, size = 0x200, scoped, tag = 'scratch operand']
  %s0 = inlined_call_operand.hbm [shape: f32[32,128], index: 0, kind: input, shape index: {}]
  %s1 = inlined_call_operand.hbm [shape: f32[32,128], index: 1, kind: input, shape index: {}]
  %s2 = inlined_call_operand.hbm [shape: f32[1,1], index: 2, kind: output, shape index: {}]
  %s3 = sld [smem:[#allocation0]]
  $region53: #{gradient_constraint_loss.1} parent=0
    _
  %s5 = ssub.s32 1, %s3
  %s6 = scalar_select 0, %s5, %s3
  $region1: #{gradient_constraint_loss.1} parent=0
    #allocation3 [shape = 'u8[8192]{0}', space=vmem, size = 0x2000, scoped, tag = 'input window, operand 0']
    #allocation4 [shape = 's32[2]{0}', space=sflag, size = 0x8, scoped, tag = 'scoped memory for gradient_constraint_loss.1']
    #allocation5 [shape = 's32[2]{0}', space=sflag, size = 0x8, scoped, tag = 'scoped memory for gradient_constraint_loss.1']
    #allocation6 [shape = 'u8[8192]{0}', space=vmem, size = 0x2000, scoped, tag = 'input window, operand 1']
    #allocation7 [shape = 's32[2]{0}', space=sflag, size = 0x8, scoped, tag = 'scoped memory for gradient_constraint_loss.1']
    #allocation8 [shape = 'u8[512]{0}', space=smem, size = 0x200, scoped, tag = 'output window, operand 0, single buffered']
    %7 = vsyncpa [#allocation4], 0
    %s8 = scalar_lea.sflag [#allocation4], 1
    %9 = vsyncpa %s8, 0
    %10 = vsyncpa [#allocation7], 0
    %s11 = scalar_lea.sflag [#allocation7], 1
    %12 = vsyncpa %s11, 0
    %13 = vsyncpa [#allocation5], 0
    loop: start=0, step=1, limit=6
    $region2: #{gradient_constraint_loss.1} parent=1 // loop_pre_header
      _
    $region3: #{gradient_constraint_loss.1} parent=1 // loop_header
      %s15 = sphi 0, %s19
      %p16 = scmp.ge.s32.totalorder %s15, 6
      %s25 = sphi 0, %s27
      %s28 = sphi 0, %s25
      %s29 = sphi 0, %s28
      %s45 = sphi 0, %s29
      %s51 = sphi 0, %s53
      %s54 = sphi 0, %s51
      %s55 = sphi 0, %s54
      %s71 = sphi 0, %s55
      %s75 = sphi 0, %s75
      %s77 = sphi 0, %s75
      %s78 = sphi 0, %s77
      %s92 = sphi 0, %s78
    $region4: #{gradient_constraint_loss.1} parent=1 // loop_header_branch
      %18 = sbr.rel (%p16) target = $region8
    $region5: #{gradient_constraint_loss.1} parent=1 // loop_body
      %s20 = ssub.s32 %s15, 1
      %s21 = ssub.s32 %s15, 2
      %s22 = sadd.s32 %s15, 1
      %s23 = ssub.s32 %s15, %s22
      %p24 = scmp.eq.s32.totalorder %s23, 0
      %s26 = sadd.s32 %s25, 1
      %s27 = scalar_select %p24, %s25, %s26
      %p30 = pneg %p24
      %p31 = scmp.eq.s32.totalorder %s15, 3
      %p32 = por %p30, %p31
      %p33 = scmp.ne.s32.totalorder %s25, %s28
      %p34 = scmp.eq.s32.totalorder %s15, 0
      %p35 = por %p33, %p34
      %p36 = scmp.ne.s32.totalorder %s25, %s28
      %p37 = scmp.eq.s32.totalorder %s20, 3
      %p38 = por %p36, %p37
      %p39 = scmp.ne.s32.totalorder %s28, %s29
      %p40 = scmp.eq.s32.totalorder %s20, 0
      %p41 = por %p39, %p40
      %p42 = scmp.ne.s32.totalorder %s28, %s29
      %p43 = scmp.eq.s32.totalorder %s21, 3
      %p44 = por %p42, %p43
      %p46 = scmp.ne.s32.totalorder %s29, %s45
      %p47 = scmp.eq.s32.totalorder %s21, 0
      %p48 = por %p46, %p47
      %s49 = ssub.s32 %s15, %s22
      %p50 = scmp.eq.s32.totalorder %s49, 0
      %s52 = sadd.s32 %s51, 1
      %s53 = scalar_select %p50, %s51, %s52
      %p56 = pneg %p50
      %p57 = scmp.eq.s32.totalorder %s15, 3
      %p58 = por %p56, %p57
      %p59 = scmp.ne.s32.totalorder %s51, %s54
      %p60 = scmp.eq.s32.totalorder %s15, 0
      %p61 = por %p59, %p60
      %p62 = scmp.ne.s32.totalorder %s51, %s54
      %p63 = scmp.eq.s32.totalorder %s20, 3
      %p64 = por %p62, %p63
      %p65 = scmp.ne.s32.totalorder %s54, %s55
      %p66 = scmp.eq.s32.totalorder %s20, 0
      %p67 = por %p65, %p66
      %p68 = scmp.ne.s32.totalorder %s54, %s55
      %p69 = scmp.eq.s32.totalorder %s21, 3
      %p70 = por %p68, %p69
      %p72 = scmp.ne.s32.totalorder %s55, %s71
      %p73 = scmp.eq.s32.totalorder %s21, 0
      %p74 = por %p72, %p73
      %s76 = sadd.s32 %s75, 1
      %p79 = scmp.eq.s32.totalorder %s15, 3
      %p80 = scmp.ne.s32.totalorder %s75, %s77
      %p81 = scmp.eq.s32.totalorder %s15, 0
      %p82 = por %p80, %p81
      %p83 = scmp.ne.s32.totalorder %s75, %s77
      %p84 = scmp.eq.s32.totalorder %s20, 3
      %p85 = por %p83, %p84
      %p86 = scmp.ne.s32.totalorder %s77, %s78
      %p87 = scmp.eq.s32.totalorder %s20, 0
      %p88 = por %p86, %p87
      %p89 = scmp.ne.s32.totalorder %s77, %s78
      %p90 = scmp.eq.s32.totalorder %s21, 3
      %p91 = por %p89, %p90
      %p93 = scmp.ne.s32.totalorder %s78, %s92
      %p94 = scmp.eq.s32.totalorder %s21, 0
      %p95 = por %p93, %p94
      %p96 = scmp.le.s32.totalorder 1, %s15
      %p97 = scmp.lt.s32.totalorder %s15, 5
      %p98 = pnand %p96, %p97
      %p99 = pneg %p98
      // Predicated region
      $region9: #{gradient_constraint_loss.1} parent=5 // pred_check
        _
      $region10: #{gradient_constraint_loss.1} parent=5 // pred_check_branch
        %101 = sbr.rel (%p98) target = $region12
      $region11: #{gradient_constraint_loss.1} parent=5 // pred_region
        %s102 = ssub.s32 %s15, 1
      $region12: #{gradient_constraint_loss.1} parent=5 // pred_fallthru
        _
      %p103 = scmp.lt.s32.totalorder %s15, 4
      // Predicated region
      $region13: #{gradient_constraint_loss.1} parent=5 // pred_check
        %p104 = pneg %p103
      $region14: #{gradient_constraint_loss.1} parent=5 // pred_check_branch
        %106 = sbr.rel (%p104) target = $region16
      $region15: #{gradient_constraint_loss.1} parent=5 // pred_region
        // Predicated region
        $region17: #{gradient_constraint_loss.1} parent=15 // pred_check
          %p107 = pneg %p35
        $region18: #{gradient_constraint_loss.1} parent=15 // pred_check_branch
          %109 = sbr.rel (%p107) target = $region20
        $region19: #{gradient_constraint_loss.1} parent=15 // pred_region
          %s110 = sand.u32 %s25, 1
          %s111 = scalar_lea.sflag [#allocation4], %s110
          %s112 = sand.u32 %s25, 1
          %s113 = smul.addr %s112, 8
          %s114 = scalar_lea.vmem [#allocation3], %s113
          %116 = vsyncadd %s111, 0
          %s117 = smul.addr %s15, 8
          %s118 = scalar_lea.hbm %s0, %s117
          %s120 = sshll.u32 %s118, 4
          %s121 = int_to_ptr.hbm [resolvable:$true] %s120
          %s122 = sshll.u32 %s114, 4
          %s123 = int_to_ptr.vmem [resolvable:$true] %s122
          %125 = dma.hbm_to_vmem [thread:$0]  %s121, 128, %s123, %s111
        $region20: #{gradient_constraint_loss.1} parent=15 // pred_fallthru
          _
        // Predicated region
        $region21: #{gradient_constraint_loss.1} parent=15 // pred_check
          %p126 = pneg %p61
        $region22: #{gradient_constraint_loss.1} parent=15 // pred_check_branch
          %128 = sbr.rel (%p126) target = $region24
        $region23: #{gradient_constraint_loss.1} parent=15 // pred_region
          %s129 = sand.u32 %s51, 1
          %s130 = scalar_lea.sflag [#allocation7], %s129
          %s131 = sand.u32 %s51, 1
          %s132 = smul.addr %s131, 8
          %s133 = scalar_lea.vmem [#allocation6], %s132
          %135 = vsyncadd %s130, 0
          %s136 = smul.addr %s15, 8
          %s137 = scalar_lea.hbm %s1, %s136
          %s139 = sshll.u32 %s137, 4
          %s140 = int_to_ptr.hbm [resolvable:$true] %s139
          %s141 = sshll.u32 %s133, 4
          %s142 = int_to_ptr.vmem [resolvable:$true] %s141
          %144 = dma.hbm_to_vmem [thread:$0]  %s140, 128, %s142, %s130
        $region24: #{gradient_constraint_loss.1} parent=15 // pred_fallthru
          _
      $region16: #{gradient_constraint_loss.1} parent=5 // pred_fallthru
        _
      %p145 = scmp.le.s32.totalorder 1, %s15
      %p146 = scmp.lt.s32.totalorder %s15, 5
      %p147 = pnand %p145, %p146
      %p148 = pneg %p147
      // Predicated region
      $region25: #{gradient_constraint_loss.1} parent=5 // pred_check
        _
      $region26: #{gradient_constraint_loss.1} parent=5 // pred_check_branch
        %150 = sbr.rel (%p147) target = $region28
      $region27: #{gradient_constraint_loss.1} parent=5 // pred_region
        %s151 = ssub.s32 %s15, 1
        %s152 = sand.u32 %s28, 1
        %s153 = scalar_lea.sflag [#allocation4], %s152
        %s154 = sand.u32 %s28, 1
        %s155 = smul.addr %s154, 8
        %s156 = scalar_lea.vmem [#allocation3], %s155
        // Predicated region
        $region29: #{gradient_constraint_loss.1} parent=27 // pred_check
          %p157 = pneg %p41
        $region30: #{gradient_constraint_loss.1} parent=27 // pred_check_branch
          %159 = sbr.rel (%p157) target = $region32
        $region31: #{gradient_constraint_loss.1} parent=27 // pred_region
          %161 = dma.done %s153, 128
        $region32: #{gradient_constraint_loss.1} parent=27 // pred_fallthru
          _
        %s162 = sand.u32 %s54, 1
        %s163 = scalar_lea.sflag [#allocation7], %s162
        %s164 = sand.u32 %s54, 1
        %s165 = smul.addr %s164, 8
        %s166 = scalar_lea.vmem [#allocation6], %s165
        // Predicated region
        $region33: #{gradient_constraint_loss.1} parent=27 // pred_check
          %p167 = pneg %p67
        $region34: #{gradient_constraint_loss.1} parent=27 // pred_check_branch
          %169 = sbr.rel (%p167) target = $region36
        $region35: #{gradient_constraint_loss.1} parent=27 // pred_region
          %171 = dma.done %s163, 128
        $region36: #{gradient_constraint_loss.1} parent=27 // pred_fallthru
          _
        %s172 = sand.u32 %s28, 1
        %s173 = scalar_lea.sflag [#allocation4], %s172
        %s174 = sand.u32 %s28, 1
        %s175 = smul.addr %s174, 8
        %s176 = scalar_lea.vmem [#allocation3], %s175
        %p177 = pneg %p41
        %p178 = pneg %p38
        %s179 = sand.u32 %s54, 1
        %s180 = scalar_lea.sflag [#allocation7], %s179
        %s181 = sand.u32 %s54, 1
        %s182 = smul.addr %s181, 8
        %s183 = scalar_lea.vmem [#allocation6], %s182
        %p184 = pneg %p67
        %p185 = pneg %p64
        %p186 = pneg %p88
        %p187 = pneg %p85
        %p188 = scmp.eq.s32.totalorder %s20, 0
        // Predicated region
        $region37: #{gradient_constraint_loss.1} parent=27 // pred_check
          %p189 = pneg %p188
        $region38: #{gradient_constraint_loss.1} parent=27 // pred_check_branch
          %191 = sbr.rel (%p189) target = $region40
        $region39: #{gradient_constraint_loss.1} parent=27 // pred_region
          %s192 = scalar_lea.smem [#allocation2], 0
          %193 = sst [smem:[%s192]] 0.0
          %s194 = scalar_lea.smem [#allocation2], 1
          %195 = sst [smem:[%s194]] 0.0
          %s196 = scalar_lea.smem [#allocation2], 2
          %197 = sst [smem:[%s196]] 0.0
        $region40: #{gradient_constraint_loss.1} parent=27 // pred_fallthru
          _
        %v198 = vld [vmem:[%s156] sm:$0xff]
        %v199 = vld [vmem:[%s166] sm:$0xff]
        %v200 = vsub.f32 %v198, %v199
        %s201 = sld [smem:[#allocation2]]
        %v202 = vmul.f32 %v200, %v200
        %203 = vadd.xlane.f32.xlu0 %v202
        %v204 = vpop.xlane.xlu0 %203
        %v205 = vrot.slane %v204, 4
        %v206 = vadd.f32 %v204, %v205
        %v207 = vrot.slane %v206, 2
        %v208 = vadd.f32 %v206, %v207
        %v209 = vrot.slane %v208, 1
        %v210 = vadd.f32 %v208, %v209
        %s211 = vtos %v210
        %s212 = sadd.f32 %s201, %s211
        %s213 = scalar_lea.smem [#allocation2], 0
        %214 = sst [smem:[%s213]] %s212
        %216 = vrot.lane.b32.xlu0 %v198, 1
        %v217 = vpop.permute.xlu0 %216
        %v219 = vsub.f32 %v198, %v217
        %v220 = vand.u32 2147483647, %v219
        %222 = vrot.lane.b32.xlu0 %v199, 1
        %v223 = vpop.permute.xlu0 %222
        %v225 = vsub.f32 %v199, %v223
        %v226 = vand.u32 2147483647, %v225
        %v227 = vsub.f32 %v220, %v226
        %s228 = sld [smem:[#allocation2 + $0x1]]
        %v229 = vmul.f32 %v227, %v227
        %231 = vrot.lane.b32.xlu0 %v229, 127
        %v232 = vpop.permute.xlu0 %231
        %vm234 = vcmask 1039360
        %v235 = vsel %vm234, %v232, 0.0
        %236 = vadd.xlane.f32.xlu0 %v235
        %v237 = vpop.xlane.xlu0 %236
        %v238 = vrot.slane %v237, 4
        %v239 = vadd.f32 %v237, %v238
        %v240 = vrot.slane %v239, 2
        %v241 = vadd.f32 %v239, %v240
        %v242 = vrot.slane %v241, 1
        %v243 = vadd.f32 %v241, %v242
        %s244 = vtos %v243
        %s245 = sadd.f32 %s228, %s244
        %s246 = scalar_lea.smem [#allocation2], 1
        %247 = sst [smem:[%s246]] %s245
        %v248 = vmax.f32 %v226, 0.15
        %v249 = vsub.f32 %v220, %v248
        %v250 = vmax.f32 %v249, 0.0
        %s251 = sld [smem:[#allocation2 + $0x2]]
        %v252 = vmul.f32 %v250, %v250
        %254 = vrot.lane.b32.xlu0 %v252, 127
        %v255 = vpop.permute.xlu0 %254
        %v257 = vsel %vm234, %v255, 0.0
        %258 = vadd.xlane.f32.xlu0 %v257
        %v259 = vpop.xlane.xlu0 %258
        %v260 = vrot.slane %v259, 4
        %v261 = vadd.f32 %v259, %v260
        %v262 = vrot.slane %v261, 2
        %v263 = vadd.f32 %v261, %v262
        %v264 = vrot.slane %v263, 1
        %v265 = vadd.f32 %v263, %v264
        %s266 = vtos %v265
        %s267 = sadd.f32 %s251, %s266
        %s268 = scalar_lea.smem [#allocation2], 2
        %269 = sst [smem:[%s268]] %s267
        %s270 = sld [smem:[#allocation2]]
        %s271 = smul.f32 %s270, 0.00024414063
        %s272 = sld [smem:[#allocation2 + $0x1]]
        %s273 = smul.f32 %s272, 7.38189e-05
        %s274 = sadd.f32 %s271, %s273
        %s275 = sld [smem:[#allocation2 + $0x2]]
        %s276 = smul.f32 %s275, 2.46063e-05
        %s277 = sadd.f32 %s274, %s276
        %s278 = scalar_lea.smem [#allocation8], 0
        %279 = sst [smem:[%s278]] %s277
        // Predicated region
        $region41: #{gradient_constraint_loss.1} parent=27 // pred_check
          %p280 = pneg %p85
        $region42: #{gradient_constraint_loss.1} parent=27 // pred_check_branch
          %282 = sbr.rel (%p280) target = $region44
        $region43: #{gradient_constraint_loss.1} parent=27 // pred_region
          %284 = vsyncadd [#allocation5], 0
          %s286 = sshll.u32 %s2, 4
          %s287 = int_to_ptr.hbm [resolvable:$true] %s286
          %289 = dma.smem_to_hbm [#allocation8], 16, %s287, [#allocation5]
        $region44: #{gradient_constraint_loss.1} parent=27 // pred_fallthru
          _
        // Predicated region
        $region45: #{gradient_constraint_loss.1} parent=27 // pred_check
          %p290 = pneg %p85
        $region46: #{gradient_constraint_loss.1} parent=27 // pred_check_branch
          %292 = sbr.rel (%p290) target = $region48
        $region47: #{gradient_constraint_loss.1} parent=27 // pred_region
          %294 = dma.done [#allocation5], 16
        $region48: #{gradient_constraint_loss.1} parent=27 // pred_fallthru
          _
        %295 = sfence
      $region28: #{gradient_constraint_loss.1} parent=5 // pred_fallthru
        _
      %p296 = scmp.le.s32.totalorder 2, %s15
      // Predicated region
      $region49: #{gradient_constraint_loss.1} parent=5 // pred_check
        %p297 = pneg %p296
      $region50: #{gradient_constraint_loss.1} parent=5 // pred_check_branch
        %299 = sbr.rel (%p297) target = $region52
      $region51: #{gradient_constraint_loss.1} parent=5 // pred_region
        %s300 = ssub.s32 %s15, 2
      $region52: #{gradient_constraint_loss.1} parent=5 // pred_fallthru
        _
    $region6: #{gradient_constraint_loss.1} parent=1 // loop_footer
      %s19 = sadd.s32 1, %s15
    $region7: #{gradient_constraint_loss.1} parent=1 // loop_footer_branch
      %14 = sbr.rel target = $region3
    $region8: #{gradient_constraint_loss.1} parent=1 // loop_exit
      _
    %301 = vsyncpa [#allocation4], 1
    %s302 = scalar_lea.sflag [#allocation4], 1
    %303 = vsyncpa %s302, 1
    %304 = vsyncpa [#allocation7], 1
    %s305 = scalar_lea.sflag [#allocation7], 1
    %306 = vsyncpa %s305, 1
    %307 = vsyncpa [#allocation5], 1
    %s308 = scalar_lea.sflag [#allocation5], 1
    %309 = vsyncpa %s308, 1

</llo_original>
